<compile_context>
chip_gen: v7x
topology: tpu7x:2x2x1
jax: 0.10.0
libtpu: 0.0.40
codegen_flags: <defaults>
</compile_context>

<pallas_src>
import functools

import jax
import jax.numpy as jnp
from jax import lax
from jax.experimental import pallas as pl
from jax.experimental.pallas import tpu as pltpu


def _cdiv(a, b):
    return (a + b - 1) // b


def _round_up(x, m):
    return _cdiv(x, m) * m


def _round_down(x, m):
    return (x // m) * m


def _device_tuning():
    """Per-generation (block_budget_bytes, default max_tile_n, min_row_blocks)."""
    try:
        kind = jax.devices()[0].device_kind.lower()
    except Exception:  # pragma: no cover - defensive
        kind = ""
    if "v7" in kind:
        # 2 TensorCores/chip, 32 MiB scoped-VMEM default, ~3.2 TB/s HBM:
        # bigger blocks amortize the ~0.35us/step overhead; feed both cores.
        return 6 << 20, 512, 2
    if "v6" in kind:
        # 1 TC, 32 MiB scoped default (128 MiB physical), ~1.4 TB/s.
        return 6 << 20, 512, 1
    # v5e & unknown: 16 MiB scoped-VMEM default, ~0.8 TB/s -> ~2 MiB blocks.
    return 2 << 20, 256, 1


def _ce_kernel(logits_ref, labels_ref, loss_ref, m_sc, l_sc, p_sc, *,
               ignore_index, num_classes, mask_c_tail):
    """One (row_block, class_block) grid step of streaming cross entropy.

    Scratch (persistent across the class axis, re-initialised per row block):
      m_sc: running row max, l_sc: running sum(exp(x - m)), p_sc: picked logit.
    """
    j = pl.program_id(1)
    nj = pl.num_programs(1)

    @pl.when(j == 0)
    def _init():
        m_sc[...] = jnp.full_like(m_sc, -jnp.inf)
        l_sc[...] = jnp.zeros_like(l_sc)
        p_sc[...] = jnp.zeros_like(p_sc)

    # Stream the tile in its native dtype; do all math in f32.
    x = logits_ref[...].astype(jnp.float32)               # (tile_n, tile_c)
    tn, tc = x.shape
    labels = labels_ref[...]                               # (tile_n, 1) int32

    # Block-relative column index, built once as (1, tile_c) and broadcast by
    # the compares below (no full-tile iota, no full-tile "+ j*tc" add).
    col = lax.broadcasted_iota(jnp.int32, (1, tc), 1)

    if mask_c_tail:
        # Out-of-bounds tail columns (only the last class block has them) are
        # garbage and may contain NaN/Inf -> mask BEFORE any max/exp.
        limit = num_classes - j * tc                       # scalar
        x = jnp.where(col < limit, x, jnp.finfo(jnp.float32).min)

    # Online (streaming) logsumexp along the class (lane) axis.
    m_prev = m_sc[...]
    m_new = jnp.maximum(m_prev, jnp.max(x, axis=-1, keepdims=True))
    alpha = jnp.exp(m_prev - m_new)                        # == 0 on first block
    l_sc[...] = alpha * l_sc[...] + jnp.sum(jnp.exp(x - m_new), axis=-1,
                                            keepdims=True)
    m_sc[...] = m_new

    # Logit at the label index via block-relative where-select (no gather).
    rel_label = labels - j * tc                            # (tile_n, 1)
    p_sc[...] += jnp.sum(jnp.where(col == rel_label, x, 0.0),
                         axis=-1, keepdims=True)

    @pl.when(j == nj - 1)
    def _finalize():
        per_row = jnp.log(l_sc[...]) + m_sc[...] - p_sc[...]   # -log_softmax[label]
        valid = labels != ignore_index                          # drops ignored + OOB rows
        loss_ref[...] = jnp.where(valid, per_row, 0.0)


def cross_entropy_loss(logits, labels, *, name="ce_loss", weight=1.0,
                       ignore_index=-100, max_tile_n=None, max_tile_c=None):
    """Pallas TPU implementation of CrossEntropyLoss.forward.

    logits: (N, C) float, labels: (N,) integer class indices (or ignore_index).
    Returns {name: weight * mean CE over non-ignored labels} as float32.
    (If every label == ignore_index the result is NaN, matching PyTorch.)
    """
    n, c = logits.shape
    if not jnp.issubdtype(logits.dtype, jnp.floating):
        logits = logits.astype(jnp.float32)
    itemsize = jnp.dtype(logits.dtype).itemsize
    row_align = {4: 8, 2: 16, 1: 32}.get(itemsize, 8)

    budget, dev_tile_n, min_row_blocks = _device_tuning()
    if max_tile_n is None:
        max_tile_n = dev_tile_n

    # ---- row (sublane) tiling -------------------------------------------
    cap_n = max(row_align, _round_down(max_tile_n, row_align))
    if n <= row_align:
        tile_n = n                                   # full-dim block
    else:
        target_rb = max(min_row_blocks, _cdiv(n, cap_n))
        tile_n = _round_up(_cdiv(n, target_rb), row_align)
        tile_n = min(tile_n, _round_down(n, row_align), cap_n)
    num_rb = _cdiv(n, tile_n)

    # ---- class (lane) tiling ----------------------------------------------
    # Budget-derived cap (applied after tile_n so row-splitting keeps the
    # streamed block size), then balanced so the tail waste is < 128 lanes.
    if max_tile_c is None:
        max_tile_c = max(128, budget // (tile_n * itemsize))
    cap_c = max(128, _round_down(max_tile_c, 128))
    num_cb = _cdiv(c, cap_c)
    if num_cb == 1:
        tile_c = c                                   # full-dim block
    else:
        tile_c = _round_up(_cdiv(c, num_cb), 128)
        num_cb = _cdiv(c, tile_c)
    mask_c_tail = (num_cb * tile_c) != c

    # Labels: pad (cheap, N*4 bytes) so tail rows get ignore_index and drop
    # out of both the sum and the denominator.  Logits are NOT padded.
    labels_i32 = labels.astype(jnp.int32)
    n_rows = num_rb * tile_n
    labels2d = labels_i32.reshape(n, 1)
    if n_rows != n:
        labels2d = jnp.pad(labels2d, ((0, n_rows - n), (0, 0)),
                           constant_values=ignore_index)

    kernel = functools.partial(_ce_kernel, ignore_index=ignore_index,
                               num_classes=c, mask_c_tail=mask_c_tail)

    # Output = masked per-row losses (n_rows * 4 bytes, ~1/C of input traffic).
    # Block (tile_n, 1): second-to-last dim is sublane-aligned (or full dim),
    # last dim == full array dim, so the tiling rule is satisfied.
    row_losses = pl.pallas_call(
        kernel,
        out_shape=jax.ShapeDtypeStruct((n_rows, 1), jnp.float32),
        grid_spec=pltpu.PrefetchScalarGridSpec(
            num_scalar_prefetch=0,
            grid=(num_rb, num_cb),
            in_specs=[
                pl.BlockSpec((tile_n, tile_c), lambda i, j: (i, j)),
                pl.BlockSpec((tile_n, 1), lambda i, j: (i, 0)),
            ],
            out_specs=pl.BlockSpec((tile_n, 1), lambda i, j: (i, 0)),
            scratch_shapes=[
                pltpu.VMEM((tile_n, 1), jnp.float32),   # running max m
                pltpu.VMEM((tile_n, 1), jnp.float32),   # running sum l
                pltpu.VMEM((tile_n, 1), jnp.float32),   # picked logit
            ],
        ),
        compiler_params=pltpu.CompilerParams(
            dimension_semantics=("parallel", "arbitrary"),
        ),
        cost_estimate=pl.CostEstimate(
            flops=6 * n * c,
            transcendentals=n * c,
            bytes_accessed=n * c * itemsize + n * 4 + n_rows * 4,
        ),
    )(logits, labels2d)

    # PyTorch 'mean' semantics: divide by the number of non-ignored targets.
    count = jnp.sum((labels_i32 != ignore_index).astype(jnp.float32))
    loss = jnp.sum(row_losses) / count
    return {name: jnp.float32(weight) * loss}


def _ref_ce(logits, labels, ignore_index=-100):
    """Pure-JAX reference matching F.cross_entropy(reduction='mean')."""
    x = logits.astype(jnp.float32)
    n, c = x.shape
    lse = jax.nn.logsumexp(x, axis=-1)
    picked = x[jnp.arange(n), jnp.clip(labels, 0, c - 1)]
    per = lse - picked
    valid = labels != ignore_index
    return jnp.sum(jnp.where(valid, per, 0.0)) / jnp.sum(valid.astype(jnp.float32))


if __name__ == "__main__":
    key = jax.random.PRNGKey(0)
    k1, k2, k3, k4 = jax.random.split(key, 4)

    # Case 1: single-block path (batch=8, classes=32), f32, auto tiles.
    N1, C1 = 8, 32
    logits1 = jax.random.normal(k1, (N1, C1), dtype=jnp.float32)
    labels1 = jax.random.randint(k2, (N1,), 0, C1, dtype=jnp.int32)
    out1 = cross_entropy_loss(logits1, labels1, name="ce_loss", weight=1.0)
    v1 = jax.block_until_ready(out1["ce_loss"])
    r1 = _ref_ce(logits1, labels1)
    assert jnp.allclose(v1, r1, atol=1e-5, rtol=1e-5), (v1, r1)

    # Case 2: tiled path with row AND class tails (grid 2x3, no logits padding),
    # bf16 streaming, in-kernel tail-column masking, ignore_index, weight.
    N2, C2 = 21, 300
    logits2 = jax.random.normal(k3, (N2, C2), dtype=jnp.float32).astype(jnp.bfloat16)
    labels2 = jax.random.randint(k4, (N2,), 0, C2, dtype=jnp.int32)
    labels2 = labels2.at[3].set(-100)
    out2 = cross_entropy_loss(logits2, labels2, weight=0.5,
                              max_tile_n=16, max_tile_c=128)
    v2 = jax.block_until_ready(out2["ce_loss"])
    r2 = 0.5 * _ref_ce(logits2, labels2)
    assert jnp.allclose(v2, r2, atol=1e-4, rtol=1e-4), (v2, r2)

    print("KERNEL_OK")
</pallas_src>

<mosaic_0001>
module attributes {stable_mosaic.version = 11 : i64} {
  func.func @_ce_kernel(%arg0: i32, %arg1: i32, %arg2: memref<8x32xf32, #tpu.memory_space<vmem>>, %arg3: memref<8x1xi32, #tpu.memory_space<vmem>>, %arg4: memref<8x1xf32, #tpu.memory_space<vmem>>, %arg5: memref<8x1xf32, #tpu.memory_space<vmem>>, %arg6: memref<8x1xf32, #tpu.memory_space<vmem>>, %arg7: memref<8x1xf32, #tpu.memory_space<vmem>>) attributes {dimension_semantics = [#tpu.dimension_semantics<parallel>, #tpu.dimension_semantics<arbitrary>], iteration_bounds = array<i64: 1, 1>, scalar_prefetch = 0 : i64, scratch_operands = 3 : i64, tpu.core_type = #tpu.core_type<tc>, window_params = [{transform_indices = @transform_0, window_bounds = array<i64: 8, 32>}, {transform_indices = @transform_1, window_bounds = array<i64: 8, 1>}, {transform_indices = @transform_2, window_bounds = array<i64: 8, 1>}]} {
    %c0_i32 = arith.constant 0 : i32
    %0 = arith.cmpi eq, %arg1, %c0_i32 : i32
    %1 = arith.extui %0 : i1 to i32
    %c0_i32_0 = arith.constant 0 : i32
    %2 = arith.cmpi ne, %1, %c0_i32_0 : i32
    scf.if %2 {
      %cst_21 = arith.constant 0xFF800000 : f32
      %38 = vector.broadcast %cst_21 : f32 to vector<8x1xf32>
      %c0_22 = arith.constant 0 : index
      %c0_23 = arith.constant 0 : index
      %39 = vector.load %arg5[%c0_22, %c0_23] : memref<8x1xf32, #tpu.memory_space<vmem>>, vector<8x1xf32>
      tpu.vector_store %arg5[%c0_22, %c0_23], %38 {strides = array<i32>} : memref<8x1xf32, #tpu.memory_space<vmem>>, vector<8x1xf32>,
      %cst_24 = arith.constant 0.000000e+00 : f32
      %40 = vector.broadcast %cst_24 : f32 to vector<8x1xf32>
      %c0_25 = arith.constant 0 : index
      %c0_26 = arith.constant 0 : index
      %41 = vector.load %arg6[%c0_25, %c0_26] : memref<8x1xf32, #tpu.memory_space<vmem>>, vector<8x1xf32>
      tpu.vector_store %arg6[%c0_25, %c0_26], %40 {strides = array<i32>} : memref<8x1xf32, #tpu.memory_space<vmem>>, vector<8x1xf32>,
      %cst_27 = arith.constant 0.000000e+00 : f32
      %42 = vector.broadcast %cst_27 : f32 to vector<8x1xf32>
      %c0_28 = arith.constant 0 : index
      %c0_29 = arith.constant 0 : index
      %43 = vector.load %arg7[%c0_28, %c0_29] : memref<8x1xf32, #tpu.memory_space<vmem>>, vector<8x1xf32>
      tpu.vector_store %arg7[%c0_28, %c0_29], %42 {strides = array<i32>} : memref<8x1xf32, #tpu.memory_space<vmem>>, vector<8x1xf32>,
    } else {
    }
    %c0 = arith.constant 0 : index
    %c0_1 = arith.constant 0 : index
    %3 = vector.load %arg2[%c0, %c0_1] : memref<8x32xf32, #tpu.memory_space<vmem>>, vector<8x32xf32>
    %c0_2 = arith.constant 0 : index
    %c0_3 = arith.constant 0 : index
    %4 = vector.load %arg3[%c0_2, %c0_3] : memref<8x1xi32, #tpu.memory_space<vmem>>, vector<8x1xi32>
    %5 = tpu.iota {dimensions = array<i32: 1>} : vector<1x32xi32>
    %c0_4 = arith.constant 0 : index
    %c0_5 = arith.constant 0 : index
    %6 = vector.load %arg5[%c0_4, %c0_5] : memref<8x1xf32, #tpu.memory_space<vmem>>, vector<8x1xf32>
    %cst = arith.constant dense<0xFF800000> : vector<8xf32>
    %7 = vector.multi_reduction <maximumf>, %3, %cst [1] : vector<8x32xf32> to vector<8xf32>
    %8 = vector.shape_cast %7 : vector<8xf32> to vector<8x1xf32>
    %9 = arith.maximumf %6, %8 : vector<8x1xf32>
    %10 = arith.subf %6, %9 : vector<8x1xf32>
    %11 = math.exp %10 : vector<8x1xf32>
    %c0_6 = arith.constant 0 : index
    %c0_7 = arith.constant 0 : index
    %12 = vector.load %arg6[%c0_6, %c0_7] : memref<8x1xf32, #tpu.memory_space<vmem>>, vector<8x1xf32>
    %13 = arith.mulf %11, %12 : vector<8x1xf32>
    %14 = vector.broadcast %9 : vector<8x1xf32> to vector<8x32xf32>
    %15 = arith.subf %3, %14 : vector<8x32xf32>
    %16 = math.exp %15 : vector<8x32xf32>
    %cst_8 = arith.constant dense<0.000000e+00> : vector<8xf32>
    %17 = vector.multi_reduction <add>, %16, %cst_8 [1] : vector<8x32xf32> to vector<8xf32>
    %18 = vector.shape_cast %17 : vector<8xf32> to vector<8x1xf32>
    %19 = arith.addf %13, %18 : vector<8x1xf32>
    %c0_9 = arith.constant 0 : index
    %c0_10 = arith.constant 0 : index
    %20 = vector.load %arg6[%c0_9, %c0_10] : memref<8x1xf32, #tpu.memory_space<vmem>>, vector<8x1xf32>
    tpu.vector_store %arg6[%c0_9, %c0_10], %19 {strides = array<i32>} : memref<8x1xf32, #tpu.memory_space<vmem>>, vector<8x1xf32>,
    %c0_11 = arith.constant 0 : index
    %c0_12 = arith.constant 0 : index
    %21 = vector.load %arg5[%c0_11, %c0_12] : memref<8x1xf32, #tpu.memory_space<vmem>>, vector<8x1xf32>
    tpu.vector_store %arg5[%c0_11, %c0_12], %9 {strides = array<i32>} : memref<8x1xf32, #tpu.memory_space<vmem>>, vector<8x1xf32>,
    %c32_i32 = arith.constant 32 : i32
    %22 = arith.muli %arg1, %c32_i32 : i32
    %23 = vector.broadcast %22 : i32 to vector<8x1xi32>
    %24 = arith.subi %4, %23 : vector<8x1xi32>
    %c0_13 = arith.constant 0 : index
    %c0_14 = arith.constant 0 : index
    %25 = vector.load %arg7[%c0_13, %c0_14] : memref<8x1xf32, #tpu.memory_space<vmem>>, vector<8x1xf32>
    %26 = vector.broadcast %5 : vector<1x32xi32> to vector<8x32xi32>
    %27 = vector.broadcast %24 : vector<8x1xi32> to vector<8x32xi32>
    %28 = arith.cmpi eq, %26, %27 : vector<8x32xi32>
    %cst_15 = arith.constant 0.000000e+00 : f32
    %29 = vector.broadcast %cst_15 : f32 to vector<8x32xf32>
    %30 = arith.select %28, %3, %29 : vector<8x32xi1>, vector<8x32xf32>
    %cst_16 = arith.constant dense<0.000000e+00> : vector<8xf32>
    %31 = vector.multi_reduction <add>, %30, %cst_16 [1] : vector<8x32xf32> to vector<8xf32>
    %32 = vector.shape_cast %31 : vector<8xf32> to vector<8x1xf32>
    %33 = arith.addf %25, %32 : vector<8x1xf32>
    %c0_17 = arith.constant 0 : index
    %c0_18 = arith.constant 0 : index
    %34 = vector.load %arg7[%c0_17, %c0_18] : memref<8x1xf32, #tpu.memory_space<vmem>>, vector<8x1xf32>
    tpu.vector_store %arg7[%c0_17, %c0_18], %33 {strides = array<i32>} : memref<8x1xf32, #tpu.memory_space<vmem>>, vector<8x1xf32>,
    %c0_i32_19 = arith.constant 0 : i32
    %35 = arith.cmpi eq, %arg1, %c0_i32_19 : i32
    %36 = arith.extui %35 : i1 to i32
    %c0_i32_20 = arith.constant 0 : i32
    %37 = arith.cmpi ne, %36, %c0_i32_20 : i32
    scf.if %37 {
      %c0_21 = arith.constant 0 : index
      %c0_22 = arith.constant 0 : index
      %38 = vector.load %arg6[%c0_21, %c0_22] : memref<8x1xf32, #tpu.memory_space<vmem>>, vector<8x1xf32>
      %39 = math.log %38 : vector<8x1xf32>
      %c0_23 = arith.constant 0 : index
      %c0_24 = arith.constant 0 : index
      %40 = vector.load %arg5[%c0_23, %c0_24] : memref<8x1xf32, #tpu.memory_space<vmem>>, vector<8x1xf32>
      %41 = arith.addf %39, %40 : vector<8x1xf32>
      %c0_25 = arith.constant 0 : index
      %c0_26 = arith.constant 0 : index
      %42 = vector.load %arg7[%c0_25, %c0_26] : memref<8x1xf32, #tpu.memory_space<vmem>>, vector<8x1xf32>
      %43 = arith.subf %41, %42 : vector<8x1xf32>
      %c-100_i32 = arith.constant -100 : i32
      %44 = vector.broadcast %c-100_i32 : i32 to vector<8x1xi32>
      %45 = arith.cmpi ne, %4, %44 : vector<8x1xi32>
      %cst_27 = arith.constant 0.000000e+00 : f32
      %46 = vector.broadcast %cst_27 : f32 to vector<8x1xf32>
      %47 = arith.select %45, %43, %46 : vector<8x1xi1>, vector<8x1xf32>
      %c0_28 = arith.constant 0 : index
      %c0_29 = arith.constant 0 : index
      %48 = vector.load %arg4[%c0_28, %c0_29] : memref<8x1xf32, #tpu.memory_space<vmem>>, vector<8x1xf32>
      tpu.vector_store %arg4[%c0_28, %c0_29], %47 {strides = array<i32>} : memref<8x1xf32, #tpu.memory_space<vmem>>, vector<8x1xf32>,
    } else {
    }
    return
  }
  func.func @transform_0(%arg0: i32, %arg1: i32) -> (i32, i32) {
    %c0_i32 = arith.constant 0 : i32
    return %arg0, %arg1 : i32, i32
  }
  func.func @transform_1(%arg0: i32, %arg1: i32) -> (i32, i32) {
    %c0_i32 = arith.constant 0 : i32
    %c0_i32_0 = arith.constant 0 : i32
    return %arg0, %c0_i32 : i32, i32
  }
  func.func @transform_2(%arg0: i32, %arg1: i32) -> (i32, i32) {
    %c0_i32 = arith.constant 0 : i32
    %c0_i32_0 = arith.constant 0 : i32
    return %arg0, %c0_i32 : i32, i32
  }
}

</mosaic_0001>

<llo_original>
// kernel: tpu_custom_call.1
$region0: #{tpu_custom_call.1}
  #allocation0 [shape = 'u32[]', space=smem, size = 0x4, offset = 0x4, fixed_abs, tag = 'smem constant byte address 0x4 - core index']
  #allocation1 [shape = 'u32[144,128]{1,0:T(1,128)}', space=vmem, size = 0x12000, scoped, tag = 'internal scratch']
  #allocation2 [shape = 'f32[8,1]{1,0:T(8,128)}', space=vmem, size = 0x1000, scoped, tag = 'scratch operand']
  #allocation3 [shape = 'f32[8,1]{1,0:T(8,128)}', space=vmem, size = 0x1000, scoped, tag = 'scratch operand']
  #allocation4 [shape = 'f32[8,1]{1,0:T(8,128)}', space=vmem, size = 0x1000, scoped, tag = 'scratch operand']
  %s0 = inlined_call_operand.vmem [shape: f32[8,32], index: 0, kind: input, shape index: {}]
  %s1 = inlined_call_operand.vmem [shape: s32[8,1], index: 1, kind: input, shape index: {}]
  %s2 = inlined_call_operand.vmem [shape: f32[8,1], index: 2, kind: output, shape index: {}]
  %s3 = sld [smem:[#allocation0]]
  $region26: #{tpu_custom_call.1} parent=0
    _
  %s5 = ssub.s32 1, %s3
  %s6 = scalar_select 0, %s5, %s3
  // Predicated region
  $region2: #{tpu_custom_call.1} parent=0 // pred_check
    _
  $region3: #{tpu_custom_call.1} parent=0 // pred_check_branch
    %8 = sbr.rel (0) target = $region5
  $region4: #{tpu_custom_call.1} parent=0 // pred_region
    _
  $region5: #{tpu_custom_call.1} parent=0 // pred_fallthru
    _
  // Predicated region
  $region6: #{tpu_custom_call.1} parent=0 // pred_check
    _
  $region7: #{tpu_custom_call.1} parent=0 // pred_check_branch
    %10 = sbr.rel (0) target = $region9
  $region8: #{tpu_custom_call.1} parent=0 // pred_region
    _
  $region9: #{tpu_custom_call.1} parent=0 // pred_fallthru
    _
  %p11 = scmp.eq.s32.totalorder 0, 0
  // Predicated region
  $region10: #{tpu_custom_call.1} parent=0 // pred_check
    %p12 = pneg %p11
  $region11: #{tpu_custom_call.1} parent=0 // pred_check_branch
    %14 = sbr.rel (%p12) target = $region13
  $region12: #{tpu_custom_call.1} parent=0 // pred_region
    %vm15 = vcmask 7168
    %16 = vst.msk [vmem:[#allocation2] sm:$0xff] %vm15, -inf
    %17 = vst.msk [vmem:[#allocation3] sm:$0xff] %vm15, 0.0
    %18 = vst.msk [vmem:[#allocation4] sm:$0xff] %vm15, 0.0
  $region13: #{tpu_custom_call.1} parent=0 // pred_fallthru
    _
  %v19 = vld [vmem:[%s0] sm:$0xff]
  %v20 = vld [vmem:[%s1] sm:$0xff]
  %v21 = vlaneseq
  %v22 = vand.u32 %v21, 127
  %v23 = vld [vmem:[#allocation2] sm:$0xff]
  %vm24 = vcmask 261120
  %v25 = vsel %vm24, %v19, -inf
  %26 = vmax.xlane.f32.xlu0 %v25
  %v27 = vpop.xlane.xlu0 %26
  %v28 = vmax.f32 %v23, %v27
  %v29 = vsub.f32 %v23, %v28
  %v30 = vmul.f32 %v29, 1.442695
  %v31 = vpow.pop %v30
  %v32 = vld [vmem:[#allocation3] sm:$0xff]
  %v33 = vmul.f32 %v31, %v32
  %35 = vset.pattern.permute.xlu0 0
  %36 = vperm.xlu0 %35, %v28
  %v37 = vpop.permute.xlu0 %36
  %v39 = vsub.f32 %v19, %v37
  %v40 = vmul.f32 %v39, 1.442695
  %v41 = vpow.pop %v40
  %v42 = vsel %vm24, %v41, 0.0
  %43 = vadd.xlane.f32.xlu0 %v42
  %v44 = vpop.xlane.xlu0 %43
  %v45 = vadd.f32 %v33, %v44
  %vm46 = vcmask 7168
  %47 = vst.msk [vmem:[#allocation3] sm:$0xff] %vm46, %v45
  %48 = vst.msk [vmem:[#allocation2] sm:$0xff] %vm46, %v28
  %s49 = smul.u32 0, 32
  %v50 = vstv %s49
  %v51 = vsub.s32 %v20, %v50
  %v52 = vld [vmem:[#allocation4] sm:$0xff]
  %53 = vset.pattern.permute.xlu0 0
  %54 = vperm.xlu0 %53, %v51
  %v55 = vpop.permute.xlu0 %54
  %vm56 = vcmp.eq.s32.totalorder %v22, %v55
  %v57 = vsel %vm56, %v19, 0.0
  %v58 = vsel %vm24, %v57, 0.0
  %59 = vadd.xlane.f32.xlu0 %v58
  %v60 = vpop.xlane.xlu0 %59
  %v61 = vadd.f32 %v52, %v60
  %62 = vst.msk [vmem:[#allocation4] sm:$0xff] %vm46, %v61
  // Predicated region
  $region14: #{tpu_custom_call.1} parent=0 // pred_check
    %p63 = pneg %p11
  $region15: #{tpu_custom_call.1} parent=0 // pred_check_branch
    %65 = sbr.rel (%p63) target = $region17
  $region16: #{tpu_custom_call.1} parent=0 // pred_region
    %v66 = vld [vmem:[#allocation3] sm:$0xff]
    %v67 = vlog2.pop %v66
    %v68 = vmul.f32 %v67, 0.6931472
    %v69 = vld [vmem:[#allocation2] sm:$0xff]
    %v70 = vadd.f32 %v68, %v69
    %v71 = vld [vmem:[#allocation4] sm:$0xff]
    %v72 = vsub.f32 %v70, %v71
    %vm73 = vcmp.ne.s32.totalorder %v20, 4294967196
    %v74 = vsel %vm73, %v72, 0.0
    %75 = vst.msk [vmem:[%s2] sm:$0xff] %vm46, %v74
  $region17: #{tpu_custom_call.1} parent=0 // pred_fallthru
    _
  // Predicated region
  $region18: #{tpu_custom_call.1} parent=0 // pred_check
    _
  $region19: #{tpu_custom_call.1} parent=0 // pred_check_branch
    %77 = sbr.rel (0) target = $region21
  $region20: #{tpu_custom_call.1} parent=0 // pred_region
    _
  $region21: #{tpu_custom_call.1} parent=0 // pred_fallthru
    _
  // Predicated region
  $region22: #{tpu_custom_call.1} parent=0 // pred_check
    _
  $region23: #{tpu_custom_call.1} parent=0 // pred_check_branch
    %79 = sbr.rel (0) target = $region25
  $region24: #{tpu_custom_call.1} parent=0 // pred_region
    _
  $region25: #{tpu_custom_call.1} parent=0 // pred_fallthru
    _

</llo_original>
